<compile_context>
chip_gen: v7x
topology: tpu7x:2x2x1
jax: 0.10.0
libtpu: 0.0.40
codegen_flags: <defaults>
</compile_context>

<pallas_src>
import functools

import jax
import jax.numpy as jnp
from jax.experimental import pallas as pl
from jax.experimental.pallas import tpu as pltpu


_VMEM_LIMIT_BYTES = 40 * 1024 * 1024  # safe on v7x (64 MiB physical VMEM)


def _round_up(x, m):
    return ((x + m - 1) // m) * m


# ----------------------------------------------------------------------------
# Kernel 1: contrastive (CLIP) loss, tiled over row-blocks.
# Per grid step i the kernel sees:
#   scale (SMEM), img/txt row-blocks [tm, D], full txt/img matrices [N_pad, D].
# It emits one partial sum (broadcast over 128 lanes) per block; the wrapper
# reduces the partials and divides by N.
# ----------------------------------------------------------------------------
def _clip_kernel(scale_ref, img_blk_ref, txt_blk_ref, txt_all_ref, img_all_ref,
                 out_ref, *, n_valid):
    scale = scale_ref[0]
    img_blk = img_blk_ref[...]                       # [tm, D] (native dtype)
    txt_blk = txt_blk_ref[...]                       # [tm, D]
    tm = img_blk.shape[0]

    s = scale.astype(img_blk.dtype)
    img_s = img_blk * s                              # fold scale: tm*D mults
    txt_s = txt_blk * s

    contract = (((1,), (1,)), ((), ()))              # contract last dims (no .T)
    # image -> text logits row-block [tm, N_pad]
    logits_i = jax.lax.dot_general(img_s, txt_all_ref[...], contract,
                                   preferred_element_type=jnp.float32)
    # text -> image logits row-block [tm, N_pad] (second MXU pass keeps the
    # reduction on the lane axis instead of a sublane/XLU reduction)
    logits_t = jax.lax.dot_general(txt_s, img_all_ref[...], contract,
                                   preferred_element_type=jnp.float32)

    n_pad = logits_i.shape[1]
    if n_pad != n_valid:  # static: only emitted when batch was padded
        col = jax.lax.broadcasted_iota(jnp.int32, (tm, n_pad), 1)
        cmask = col < n_valid
        logits_i = jnp.where(cmask, logits_i, jnp.float32(-1e30))
        logits_t = jnp.where(cmask, logits_t, jnp.float32(-1e30))

    # Correct-class logit: diag = scale * <img_i, txt_i>, identical for both
    # directions (no [N,N] iota-mask extraction).
    diag = jnp.sum(img_s.astype(jnp.float32) * txt_blk.astype(jnp.float32),
                   axis=1, keepdims=True)            # [tm, 1]

    def _lse(x):
        m = jnp.max(x, axis=1, keepdims=True)
        return m + jnp.log(jnp.sum(jnp.exp(x - m), axis=1, keepdims=True))

    per_i = _lse(logits_i) - diag                    # [tm, 1]
    per_t = _lse(logits_t) - diag                    # [tm, 1]

    if n_pad != n_valid:  # static: zero out padded rows
        row = (pl.program_id(0) * tm
               + jax.lax.broadcasted_iota(jnp.int32, (tm, 1), 0))
        rmask = row < n_valid
        per_i = jnp.where(rmask, per_i, 0.0)
        per_t = jnp.where(rmask, per_t, 0.0)

    partial = 0.5 * (jnp.sum(per_i) + jnp.sum(per_t))
    out_ref[...] = jnp.broadcast_to(partial.reshape(1, 1), (1, 128))


def clip_loss_pallas(image_features, text_features, logit_scale, *,
                     block_rows=256):
    n, d = image_features.shape
    tm = min(int(block_rows), _round_up(n, 8))
    tm = max(8, tm - tm % 8)
    n_pad = _round_up(n, tm)

    img, txt = image_features, text_features
    if n_pad != n:
        img = jnp.pad(img, ((0, n_pad - n), (0, 0)))
        txt = jnp.pad(txt, ((0, n_pad - n), (0, 0)))
    nb = n_pad // tm

    scale = jnp.asarray(logit_scale, jnp.float32).reshape(1)
    itemsize = image_features.dtype.itemsize

    out = pl.pallas_call(
        functools.partial(_clip_kernel, n_valid=n),
        out_shape=jax.ShapeDtypeStruct((1, nb * 128), jnp.float32),
        grid=(nb,),
        in_specs=[
            pl.BlockSpec(memory_space=pltpu.SMEM),        # logit_scale (1,)
            pl.BlockSpec((tm, d), lambda i: (i, 0)),      # img row-block
            pl.BlockSpec((tm, d), lambda i: (i, 0)),      # txt row-block
            pl.BlockSpec((n_pad, d), lambda i: (0, 0)),   # txt full (resident)
            pl.BlockSpec((n_pad, d), lambda i: (0, 0)),   # img full (resident)
        ],
        out_specs=pl.BlockSpec((1, 128), lambda i: (0, i)),
        compiler_params=pltpu.CompilerParams(
            dimension_semantics=("parallel",),
            vmem_limit_bytes=_VMEM_LIMIT_BYTES),
        cost_estimate=pl.CostEstimate(
            flops=int(4 * n_pad * n_pad * d),
            transcendentals=int(2 * n_pad * n_pad + 2 * n_pad),
            bytes_accessed=int(4 * n_pad * d * itemsize + nb * 128 * 4)),
    )(scale, img, txt, txt, img)

    partials = out.reshape(nb, 128)[:, 0]
    return jnp.sum(partials) / n


# ----------------------------------------------------------------------------
# Kernel 2: captioning loss, tiled over token blocks.
# Each grid step streams a [tt, V] logits block + [tt, 1] labels block and
# emits (sum of per-token losses, valid-token count) broadcast over 128 lanes.
# ----------------------------------------------------------------------------
def _caption_kernel(logits_ref, labels_ref, out_ref, *, pad_id):
    lg = logits_ref[...].astype(jnp.float32)         # [tt, V]
    lbl = labels_ref[...]                            # [tt, 1] int32
    tt, vocab = lg.shape

    m = jnp.max(lg, axis=1, keepdims=True)
    lse = m + jnp.log(jnp.sum(jnp.exp(lg - m), axis=1, keepdims=True))  # [tt,1]

    vocab_iota = jax.lax.broadcasted_iota(jnp.int32, (tt, vocab), 1)
    picked = jnp.sum(jnp.where(vocab_iota == lbl, lg, 0.0), axis=1,
                     keepdims=True)                  # [tt, 1]

    valid = lbl != pad_id                            # [tt, 1] bool
    per_tok = jnp.where(valid, lse - picked, 0.0)    # masked before subtraction use
    loss_sum = jnp.sum(per_tok)
    count = jnp.sum(valid.astype(jnp.float32))

    out_ref[...] = jnp.concatenate(
        [jnp.broadcast_to(loss_sum.reshape(1, 1), (1, 128)),
         jnp.broadcast_to(count.reshape(1, 1), (1, 128))], axis=0)


def _choose_token_tile(n_tok, vocab, itemsize, budget_bytes):
    tt = budget_bytes // max(1, vocab * itemsize)
    tt = int(max(8, min(256, tt)))
    tt = max(8, tt - tt % 8)
    if tt >= n_tok:
        return n_tok
    return tt


def caption_loss_pallas(logits, labels, pad_id, *,
                        block_budget_bytes=4 * 1024 * 1024):
    b, t, v = logits.shape
    n_tok = b * t
    lg = logits.reshape(n_tok, v)
    lbl = labels.astype(jnp.int32).reshape(n_tok, 1)
    itemsize = logits.dtype.itemsize

    tt = _choose_token_tile(n_tok, v, itemsize, block_budget_bytes)
    n_pad = _round_up(n_tok, tt)
    if n_pad != n_tok:
        lg = jnp.pad(lg, ((0, n_pad - n_tok), (0, 0)))
        lbl = jnp.pad(lbl, ((0, n_pad - n_tok), (0, 0)),
                      constant_values=int(pad_id))   # padded tokens ignored
    nb = n_pad // tt

    out = pl.pallas_call(
        functools.partial(_caption_kernel, pad_id=int(pad_id)),
        out_shape=jax.ShapeDtypeStruct((2, nb * 128), jnp.float32),
        grid=(nb,),
        in_specs=[
            pl.BlockSpec((tt, v), lambda i: (i, 0)),      # logits token-block
            pl.BlockSpec((tt, 1), lambda i: (i, 0)),      # labels token-block
        ],
        out_specs=pl.BlockSpec((2, 128), lambda i: (0, i)),
        compiler_params=pltpu.CompilerParams(
            dimension_semantics=("parallel",),
            vmem_limit_bytes=_VMEM_LIMIT_BYTES),
        cost_estimate=pl.CostEstimate(
            flops=int(6 * n_pad * v),
            transcendentals=int(n_pad * v + n_pad),
            bytes_accessed=int(n_pad * v * itemsize + n_pad * 4 + nb * 256 * 4)),
    )(lg, lbl)

    parts = out.reshape(2, nb, 128)[:, :, 0]
    return jnp.sum(parts[0]) / jnp.sum(parts[1])


# ----------------------------------------------------------------------------
# CoCaLoss wrapper (no learned parameters; only scalar loss weights).
# world_size == 1, so the distributed gather path is not exercised.
# ----------------------------------------------------------------------------
class CoCaLossPallas:
    def __init__(self, caption_loss_weight, clip_loss_weight, pad_id=0,
                 clip_block_rows=256, caption_block_bytes=4 * 1024 * 1024):
        self.caption_loss_weight = float(caption_loss_weight)
        self.clip_loss_weight = float(clip_loss_weight)
        self.pad_id = int(pad_id)
        self.clip_block_rows = int(clip_block_rows)
        self.caption_block_bytes = int(caption_block_bytes)

    def __call__(self, image_features, text_features, logits, labels, logit_scale):
        if self.clip_loss_weight:
            clip_l = self.clip_loss_weight * clip_loss_pallas(
                image_features, text_features, logit_scale,
                block_rows=self.clip_block_rows)
        else:
            clip_l = jnp.asarray(0.0, jnp.float32)
        cap_l = self.caption_loss_weight * caption_loss_pallas(
            logits, labels, self.pad_id,
            block_budget_bytes=self.caption_block_bytes)
        return clip_l, cap_l


# ----------------------------------------------------------------------------
# Pure-JAX reference for a correctness sanity check.
# ----------------------------------------------------------------------------
def _reference(image_features, text_features, logits, labels, logit_scale,
               caption_w, clip_w, pad_id):
    lim = logit_scale * image_features @ text_features.T
    ltx = logit_scale * text_features @ image_features.T
    n = lim.shape[0]
    lab = jnp.arange(n)

    def ce(lg, lb):
        lse = jax.scipy.special.logsumexp(lg, axis=1)
        return jnp.mean(lse - lg[jnp.arange(lg.shape[0]), lb])

    clip_l = clip_w * 0.5 * (ce(lim, lab) + ce(ltx, lab))

    b, t, v = logits.shape
    lg = logits.reshape(b * t, v)
    lb = labels.reshape(b * t)
    lse = jax.scipy.special.logsumexp(lg, axis=1)
    per = lse - lg[jnp.arange(b * t), lb]
    valid = (lb != pad_id).astype(jnp.float32)
    cap_l = caption_w * jnp.sum(per * valid) / jnp.sum(valid)
    return clip_l, cap_l


if __name__ == "__main__":
    key = jax.random.PRNGKey(0)
    k1, k2, k3, k4 = jax.random.split(key, 4)

    N, D = 12, 32          # contrastive batch / embed dim (N not a tile multiple
                           # -> exercises the pad/mask path)
    B, T, V = 2, 7, 128    # caption batch / seq len / vocab (B*T=14 tokens)
    pad_id = 0

    image_features = jax.random.normal(k1, (N, D), dtype=jnp.float32)
    text_features = jax.random.normal(k2, (N, D), dtype=jnp.float32)
    image_features = image_features / jnp.linalg.norm(image_features, axis=1, keepdims=True)
    text_features = text_features / jnp.linalg.norm(text_features, axis=1, keepdims=True)

    cap_logits = jax.random.normal(k3, (B, T, V), dtype=jnp.float32)
    cap_labels = jax.random.randint(k4, (B, T), minval=0, maxval=V, dtype=jnp.int32)
    # force a couple of pad tokens so ignore_index is exercised
    cap_labels = cap_labels.at[0, 0].set(pad_id).at[1, 3].set(pad_id)

    logit_scale = jnp.float32(10.0)
    caption_loss_weight, clip_loss_weight = 2.0, 1.0

    ref_clip, ref_cap = _reference(image_features, text_features, cap_logits,
                                   cap_labels, logit_scale,
                                   caption_loss_weight, clip_loss_weight, pad_id)

    # Config 1: default tiles (single block per kernel at these small shapes).
    loss_mod = CoCaLossPallas(caption_loss_weight, clip_loss_weight, pad_id=pad_id)
    clip_l, cap_l = loss_mod(image_features, text_features, cap_logits, cap_labels,
                             logit_scale)
    jax.block_until_ready((clip_l, cap_l))
    assert jnp.allclose(clip_l, ref_clip, rtol=1e-4, atol=1e-5), (clip_l, ref_clip)
    assert jnp.allclose(cap_l, ref_cap, rtol=1e-4, atol=1e-5), (cap_l, ref_cap)

    # Config 2: tiny tiles to exercise the multi-block grid + padding/masking.
    loss_mod_tiled = CoCaLossPallas(caption_loss_weight, clip_loss_weight,
                                    pad_id=pad_id, clip_block_rows=8,
                                    caption_block_bytes=8 * V * 4)
    clip_l2, cap_l2 = loss_mod_tiled(image_features, text_features, cap_logits,
                                     cap_labels, logit_scale)
    jax.block_until_ready((clip_l2, cap_l2))
    assert jnp.allclose(clip_l2, ref_clip, rtol=1e-4, atol=1e-5), (clip_l2, ref_clip)
    assert jnp.allclose(cap_l2, ref_cap, rtol=1e-4, atol=1e-5), (cap_l2, ref_cap)

    print("KERNEL_OK")
</pallas_src>

<mosaic_0001>
module attributes {stable_mosaic.version = 11 : i64} {
  func.func @_clip_kernel(%arg0: i32, %arg1: memref<1xf32, #tpu.memory_space<smem>>, %arg2: memref<16x32xf32, #tpu.memory_space<vmem>>, %arg3: memref<16x32xf32, #tpu.memory_space<vmem>>, %arg4: memref<16x32xf32, #tpu.memory_space<vmem>>, %arg5: memref<16x32xf32, #tpu.memory_space<vmem>>, %arg6: memref<1x128xf32, #tpu.memory_space<vmem>>) attributes {dimension_semantics = [#tpu.dimension_semantics<parallel>], iteration_bounds = array<i64: 1>, scalar_prefetch = 0 : i64, scratch_operands = 0 : i64, tpu.core_type = #tpu.core_type<tc>, window_params = [{transform_indices = @transform_0, window_bounds = array<i64: 1>}, {transform_indices = @transform_1, window_bounds = array<i64: 16, 32>}, {transform_indices = @transform_2, window_bounds = array<i64: 16, 32>}, {pipeline_mode = #tpu.pipeline_mode<synchronous>, transform_indices = @transform_3, window_bounds = array<i64: 16, 32>}, {pipeline_mode = #tpu.pipeline_mode<synchronous>, transform_indices = @transform_4, window_bounds = array<i64: 16, 32>}, {transform_indices = @transform_5, window_bounds = array<i64: 1, 128>}]} {
    %c0 = arith.constant 0 : index
    %0 = memref.load %arg1[%c0] : memref<1xf32, #tpu.memory_space<smem>>
    %c0_0 = arith.constant 0 : index
    %c0_1 = arith.constant 0 : index
    %1 = vector.load %arg2[%c0_0, %c0_1] : memref<16x32xf32, #tpu.memory_space<vmem>>, vector<16x32xf32>
    %c0_2 = arith.constant 0 : index
    %c0_3 = arith.constant 0 : index
    %2 = vector.load %arg3[%c0_2, %c0_3] : memref<16x32xf32, #tpu.memory_space<vmem>>, vector<16x32xf32>
    %3 = vector.broadcast %0 : f32 to vector<16x32xf32>
    %4 = arith.mulf %1, %3 : vector<16x32xf32>
    %5 = vector.broadcast %0 : f32 to vector<16x32xf32>
    %6 = arith.mulf %2, %5 : vector<16x32xf32>
    %c0_4 = arith.constant 0 : index
    %c0_5 = arith.constant 0 : index
    %7 = vector.load %arg4[%c0_4, %c0_5] : memref<16x32xf32, #tpu.memory_space<vmem>>, vector<16x32xf32>
    %cst = arith.constant dense<0.000000e+00> : vector<16x16xf32>
    %8 = tpu.matmul %4, %7, %cst {dimension_numbers = #tpu.dot_dimension_numbers<[1], [1], [0], [0], [0, 0, 1, 0], [], []>} : vector<16x32xf32>, vector<16x32xf32>, vector<16x16xf32> -> vector<16x16xf32>
    %c0_6 = arith.constant 0 : index
    %c0_7 = arith.constant 0 : index
    %9 = vector.load %arg5[%c0_6, %c0_7] : memref<16x32xf32, #tpu.memory_space<vmem>>, vector<16x32xf32>
    %cst_8 = arith.constant dense<0.000000e+00> : vector<16x16xf32>
    %10 = tpu.matmul %6, %9, %cst_8 {dimension_numbers = #tpu.dot_dimension_numbers<[1], [1], [0], [0], [0, 0, 1, 0], [], []>} : vector<16x32xf32>, vector<16x32xf32>, vector<16x16xf32> -> vector<16x16xf32>
    %11 = tpu.iota {dimensions = array<i32: 1>} : vector<16x16xi32>
    %c12_i32 = arith.constant 12 : i32
    %12 = vector.broadcast %c12_i32 : i32 to vector<16x16xi32>
    %13 = arith.cmpi slt, %11, %12 : vector<16x16xi32>
    %cst_9 = arith.constant -1.000000e+30 : f32
    %14 = vector.broadcast %cst_9 : f32 to vector<16x16xf32>
    %15 = arith.select %13, %8, %14 : vector<16x16xi1>, vector<16x16xf32>
    %cst_10 = arith.constant -1.000000e+30 : f32
    %16 = vector.broadcast %cst_10 : f32 to vector<16x16xf32>
    %17 = arith.select %13, %10, %16 : vector<16x16xi1>, vector<16x16xf32>
    %18 = arith.mulf %4, %2 : vector<16x32xf32>
    %cst_11 = arith.constant dense<0.000000e+00> : vector<16xf32>
    %19 = vector.multi_reduction <add>, %18, %cst_11 [1] : vector<16x32xf32> to vector<16xf32>
    %20 = vector.shape_cast %19 : vector<16xf32> to vector<16x1xf32>
    %cst_12 = arith.constant dense<0xFF800000> : vector<16xf32>
    %21 = vector.multi_reduction <maximumf>, %15, %cst_12 [1] : vector<16x16xf32> to vector<16xf32>
    %22 = vector.shape_cast %21 : vector<16xf32> to vector<16x1xf32>
    %23 = vector.broadcast %22 : vector<16x1xf32> to vector<16x16xf32>
    %24 = arith.subf %15, %23 : vector<16x16xf32>
    %25 = math.exp %24 : vector<16x16xf32>
    %cst_13 = arith.constant dense<0.000000e+00> : vector<16xf32>
    %26 = vector.multi_reduction <add>, %25, %cst_13 [1] : vector<16x16xf32> to vector<16xf32>
    %27 = vector.shape_cast %26 : vector<16xf32> to vector<16x1xf32>
    %28 = math.log %27 : vector<16x1xf32>
    %29 = arith.addf %22, %28 : vector<16x1xf32>
    %30 = arith.subf %29, %20 : vector<16x1xf32>
    %cst_14 = arith.constant dense<0xFF800000> : vector<16xf32>
    %31 = vector.multi_reduction <maximumf>, %17, %cst_14 [1] : vector<16x16xf32> to vector<16xf32>
    %32 = vector.shape_cast %31 : vector<16xf32> to vector<16x1xf32>
    %33 = vector.broadcast %32 : vector<16x1xf32> to vector<16x16xf32>
    %34 = arith.subf %17, %33 : vector<16x16xf32>
    %35 = math.exp %34 : vector<16x16xf32>
    %cst_15 = arith.constant dense<0.000000e+00> : vector<16xf32>
    %36 = vector.multi_reduction <add>, %35, %cst_15 [1] : vector<16x16xf32> to vector<16xf32>
    %37 = vector.shape_cast %36 : vector<16xf32> to vector<16x1xf32>
    %38 = math.log %37 : vector<16x1xf32>
    %39 = arith.addf %32, %38 : vector<16x1xf32>
    %40 = arith.subf %39, %20 : vector<16x1xf32>
    %c16_i32 = arith.constant 16 : i32
    %41 = arith.muli %arg0, %c16_i32 : i32
    %42 = tpu.iota {dimensions = array<i32: 0>} : vector<16x1xi32>
    %43 = vector.broadcast %41 : i32 to vector<16x1xi32>
    %44 = arith.addi %43, %42 : vector<16x1xi32>
    %c12_i32_16 = arith.constant 12 : i32
    %45 = vector.broadcast %c12_i32_16 : i32 to vector<16x1xi32>
    %46 = arith.cmpi slt, %44, %45 : vector<16x1xi32>
    %cst_17 = arith.constant 0.000000e+00 : f32
    %47 = vector.broadcast %cst_17 : f32 to vector<16x1xf32>
    %48 = arith.select %46, %30, %47 : vector<16x1xi1>, vector<16x1xf32>
    %cst_18 = arith.constant 0.000000e+00 : f32
    %49 = vector.broadcast %cst_18 : f32 to vector<16x1xf32>
    %50 = arith.select %46, %40, %49 : vector<16x1xi1>, vector<16x1xf32>
    %51 = vector.shape_cast %48 : vector<16x1xf32> to vector<1x16x1xf32>
    %cst_19 = arith.constant dense<0.000000e+00> : vector<1xf32>
    %52 = vector.multi_reduction <add>, %51, %cst_19 [1, 2] : vector<1x16x1xf32> to vector<1xf32>
    %53 = vector.shape_cast %52 : vector<1xf32> to vector<1x1x1xf32>
    %54 = vector.extract %53[0, 0, 0] : f32 from vector<1x1x1xf32>
    %55 = vector.shape_cast %50 : vector<16x1xf32> to vector<1x16x1xf32>
    %cst_20 = arith.constant dense<0.000000e+00> : vector<1xf32>
    %56 = vector.multi_reduction <add>, %55, %cst_20 [1, 2] : vector<1x16x1xf32> to vector<1xf32>
    %57 = vector.shape_cast %56 : vector<1xf32> to vector<1x1x1xf32>
    %58 = vector.extract %57[0, 0, 0] : f32 from vector<1x1x1xf32>
    %59 = arith.addf %54, %58 : f32
    %cst_21 = arith.constant 5.000000e-01 : f32
    %60 = arith.mulf %cst_21, %59 : f32
    %61 = vector.broadcast %60 : f32 to vector<1x1xf32>
    %62 = vector.shape_cast %61 : vector<1x1xf32> to vector<1x1xf32>
    %63 = vector.broadcast %62 : vector<1x1xf32> to vector<1x128xf32>
    %c0_22 = arith.constant 0 : index
    %c0_23 = arith.constant 0 : index
    %64 = vector.load %arg6[%c0_22, %c0_23] : memref<1x128xf32, #tpu.memory_space<vmem>>, vector<1x128xf32>
    tpu.vector_store %arg6[%c0_22, %c0_23], %63 {strides = array<i32>} : memref<1x128xf32, #tpu.memory_space<vmem>>, vector<1x128xf32>,
    return
  }
  func.func @transform_0(%arg0: i32) -> i32 {
    %c0_i32 = arith.constant 0 : i32
    %c0_i32_0 = arith.constant 0 : i32
    return %c0_i32 : i32
  }
  func.func @transform_1(%arg0: i32) -> (i32, i32) {
    %c0_i32 = arith.constant 0 : i32
    %c0_i32_0 = arith.constant 0 : i32
    return %arg0, %c0_i32 : i32, i32
  }
  func.func @transform_2(%arg0: i32) -> (i32, i32) {
    %c0_i32 = arith.constant 0 : i32
    %c0_i32_0 = arith.constant 0 : i32
    return %arg0, %c0_i32 : i32, i32
  }
  func.func @transform_3(%arg0: i32) -> (i32, i32) {
    %c0_i32 = arith.constant 0 : i32
    %c0_i32_0 = arith.constant 0 : i32
    %c0_i32_1 = arith.constant 0 : i32
    return %c0_i32, %c0_i32_0 : i32, i32
  }
  func.func @transform_4(%arg0: i32) -> (i32, i32) {
    %c0_i32 = arith.constant 0 : i32
    %c0_i32_0 = arith.constant 0 : i32
    %c0_i32_1 = arith.constant 0 : i32
    return %c0_i32, %c0_i32_0 : i32, i32
  }
  func.func @transform_5(%arg0: i32) -> (i32, i32) {
    %c0_i32 = arith.constant 0 : i32
    %c0_i32_0 = arith.constant 0 : i32
    return %c0_i32, %arg0 : i32, i32
  }
}

</mosaic_0001>

<llo_original>
// kernel: tpu_custom_call.1
$region0: #{tpu_custom_call.1}
  #allocation0 [shape = 'u32[]', space=smem, size = 0x4, offset = 0x4, fixed_abs, tag = 'smem constant byte address 0x4 - core index']
  #allocation1 [shape = 'u32[144,128]{1,0:T(1,128)}', space=vmem, size = 0x12000, scoped, tag = 'internal scratch']
  #allocation2 [shape = 'f32[1]{0:T(128)S(6)}', space=smem, size = 0x200, scoped, tag = 'scoped memory for tpu_custom_call.1']
  %s0 = inlined_call_operand.<no memory space> [shape: f32[1], index: 0, kind: input, shape index: {}]
  %s1 = inlined_call_operand.hbm [shape: f32[16,32], index: 1, kind: input, shape index: {}]
  %s2 = inlined_call_operand.hbm [shape: f32[16,32], index: 2, kind: input, shape index: {}]
  %s3 = inlined_call_operand.hbm [shape: f32[16,32], index: 3, kind: input, shape index: {}]
  %s4 = inlined_call_operand.hbm [shape: f32[16,32], index: 4, kind: input, shape index: {}]
  %s5 = inlined_call_operand.hbm [shape: f32[1,128], index: 5, kind: output, shape index: {}]
  %s6 = sld [smem:[#allocation0]]
  $region46: #{tpu_custom_call.1} parent=0
    _
  %s8 = ssub.s32 1, %s6
  %s9 = scalar_select 0, %s8, %s6
  %10 = sst [smem:[#allocation2]] %s0
  $region1: #{tpu_custom_call.1} parent=0
    #allocation3 [shape = 'u8[8192]{0}', space=vmem, size = 0x2000, scoped, tag = 'input window, operand 1, single buffered']
    #allocation4 [shape = 's32[1]{0}', space=sflag, size = 0x4, scoped, tag = 'scoped memory for tpu_custom_call.1']
    #allocation5 [shape = 's32[1]{0}', space=sflag, size = 0x4, scoped, tag = 'scoped memory for tpu_custom_call.1']
    #allocation6 [shape = 'u8[8192]{0}', space=vmem, size = 0x2000, scoped, tag = 'input window, operand 2, single buffered']
    #allocation7 [shape = 's32[1]{0}', space=sflag, size = 0x4, scoped, tag = 'scoped memory for tpu_custom_call.1']
    #allocation8 [shape = 'u8[8192]{0}', space=vmem, size = 0x2000, scoped, tag = 'input window, operand 3, single buffered']
    #allocation9 [shape = 'u8[8192]{0}', space=vmem, size = 0x2000, scoped, tag = 'input window, operand 4, single buffered']
    #allocation10 [shape = 's32[1]{0}', space=sflag, size = 0x4, scoped, tag = 'scoped memory for tpu_custom_call.1']
    #allocation11 [shape = 'u8[512]{0}', space=vmem, size = 0x400, scoped, tag = 'output window, operand 0, single buffered']
    %11 = vsyncpa [#allocation4], 0
    %12 = vsyncpa [#allocation7], 0
    %13 = vsyncpa [#allocation10], 0
    %14 = vsyncpa [#allocation5], 0
    // Predicated region
    $region2: #{tpu_custom_call.1} parent=1 // pred_check
      _
    $region3: #{tpu_custom_call.1} parent=1 // pred_check_branch
      %16 = sbr.rel (0) target = $region5
    $region4: #{tpu_custom_call.1} parent=1 // pred_region
      _
    $region5: #{tpu_custom_call.1} parent=1 // pred_fallthru
      _
    // Predicated region
    $region6: #{tpu_custom_call.1} parent=1 // pred_check
      _
    $region7: #{tpu_custom_call.1} parent=1 // pred_check_branch
      %18 = sbr.rel (0) target = $region9
    $region8: #{tpu_custom_call.1} parent=1 // pred_region
      %s20 = ssub.s32 256, 256
      %21 = vsyncadd [#allocation4], %s20
      %s22 = sshll.u32 [#allocation3], 4
      %s23 = int_to_ptr.vmem [resolvable:$true] %s22
      %28 = dma.hbm_to_vmem [thread:$0]  %s1, 256, %s23, [#allocation4], 128, 128, 8
    $region9: #{tpu_custom_call.1} parent=1 // pred_fallthru
      _
    // Predicated region
    $region10: #{tpu_custom_call.1} parent=1 // pred_check
      _
    $region11: #{tpu_custom_call.1} parent=1 // pred_check_branch
      %30 = sbr.rel (0) target = $region13
    $region12: #{tpu_custom_call.1} parent=1 // pred_region
      %s32 = ssub.s32 256, 256
      %33 = vsyncadd [#allocation7], %s32
      %s34 = sshll.u32 [#allocation6], 4
      %s35 = int_to_ptr.vmem [resolvable:$true] %s34
      %40 = dma.hbm_to_vmem [thread:$0]  %s2, 256, %s35, [#allocation7], 128, 128, 8
    $region13: #{tpu_custom_call.1} parent=1 // pred_fallthru
      _
    // Predicated region
    $region14: #{tpu_custom_call.1} parent=1 // pred_check
      _
    $region15: #{tpu_custom_call.1} parent=1 // pred_check_branch
      %42 = sbr.rel (0) target = $region17
    $region16: #{tpu_custom_call.1} parent=1 // pred_region
      %s44 = ssub.s32 256, 256
      %45 = vsyncadd [#allocation7], %s44
      %s46 = sshll.u32 [#allocation8], 4
      %s47 = int_to_ptr.vmem [resolvable:$true] %s46
      %52 = dma.hbm_to_vmem [thread:$0]  %s3, 256, %s47, [#allocation7], 128, 128, 8
    $region17: #{tpu_custom_call.1} parent=1 // pred_fallthru
      _
    // Predicated region
    $region18: #{tpu_custom_call.1} parent=1 // pred_check
      _
    $region19: #{tpu_custom_call.1} parent=1 // pred_check_branch
      %54 = sbr.rel (0) target = $region21
    $region20: #{tpu_custom_call.1} parent=1 // pred_region
      %s56 = ssub.s32 256, 256
      %57 = vsyncadd [#allocation10], %s56
      %s58 = sshll.u32 [#allocation9], 4
      %s59 = int_to_ptr.vmem [resolvable:$true] %s58
      %64 = dma.hbm_to_vmem [thread:$0]  %s4, 256, %s59, [#allocation10], 128, 128, 8
    $region21: #{tpu_custom_call.1} parent=1 // pred_fallthru
      _
    // Predicated region
    $region22: #{tpu_custom_call.1} parent=1 // pred_check
      _
    $region23: #{tpu_custom_call.1} parent=1 // pred_check_branch
      %66 = sbr.rel (0) target = $region25
    $region24: #{tpu_custom_call.1} parent=1 // pred_region
      %67 = dma.done [#allocation4], 256
    $region25: #{tpu_custom_call.1} parent=1 // pred_fallthru
      _
    // Predicated region
    $region26: #{tpu_custom_call.1} parent=1 // pred_check
      _
    $region27: #{tpu_custom_call.1} parent=1 // pred_check_branch
      %69 = sbr.rel (0) target = $region29
    $region28: #{tpu_custom_call.1} parent=1 // pred_region
      %70 = dma.done [#allocation7], 256
    $region29: #{tpu_custom_call.1} parent=1 // pred_fallthru
      _
    // Predicated region
    $region30: #{tpu_custom_call.1} parent=1 // pred_check
      _
    $region31: #{tpu_custom_call.1} parent=1 // pred_check_branch
      %72 = sbr.rel (0) target = $region33
    $region32: #{tpu_custom_call.1} parent=1 // pred_region
      %73 = dma.done [#allocation7], 256
    $region33: #{tpu_custom_call.1} parent=1 // pred_fallthru
      _
    // Predicated region
    $region34: #{tpu_custom_call.1} parent=1 // pred_check
      _
    $region35: #{tpu_custom_call.1} parent=1 // pred_check_branch
      %75 = sbr.rel (0) target = $region37
    $region36: #{tpu_custom_call.1} parent=1 // pred_region
      %76 = dma.done [#allocation10], 256
    $region37: #{tpu_custom_call.1} parent=1 // pred_fallthru
      _
    %s77 = sld [smem:[#allocation2]]
    %v78 = vld [vmem:[#allocation3] sm:$0xff]
    %v79 = vld [vmem:[#allocation3 + $0x8] sm:$0xff]
    %v80 = vld [vmem:[#allocation6] sm:$0xff]
    %v81 = vld [vmem:[#allocation6 + $0x8] sm:$0xff]
    %v82 = vstv %s77
    %v83 = vmul.f32 %v78, %v82
    %v84 = vmul.f32 %v79, %v82
    %v85 = vmul.f32 %v80, %v82
    %v86 = vmul.f32 %v81, %v82
    %v87 = vld [vmem:[#allocation8] sm:$0xff]
    %v88 = vld [vmem:[#allocation8 + $0x8] sm:$0xff]
    %vm89 = vcmask 261120
    %v91 = vsel %vm89, %v83, 0
    %v94 = vsel %vm89, %v84, 0
    %v97 = vsel %vm89, %v87, 0
    %v100 = vsel %vm89, %v88, 0
    %102 = vmatprep.subr.mxu0 0.0
    %103 = vmatpush1.xpose.msra.mxu0 %v97
    %104 = vmatprep.subr.mxu0 0.0
    %105 = vmatpush1.xpose.msra.mxu0 %v100
    %106 = vmatprep.subr.mxu0 0.0
    %107 = vmatpush1.xpose.msra.mxu0 0.0
    %108 = vmatprep.subr.mxu0 0.0
    %109 = vmatpush1.xpose.msra.mxu0 0.0
    %110 = vmatprep.subr.mxu0 0.0
    %111 = vmatpush1.xpose.msra.mxu0 0.0
    %112 = vmatprep.subr.mxu0 0.0
    %113 = vmatpush1.xpose.msra.mxu0 0.0
    %114 = vmatprep.subr.mxu0 0.0
    %115 = vmatpush1.xpose.msra.mxu0 0.0
    %116 = vmatprep.subr.mxu0 0.0
    %117 = vmatpush1.xpose.msra.mxu0 0.0
    %118 = vmatprep.subr.mxu0 0.0
    %119 = vmatpush1.xpose.msra.mxu0 0.0
    %120 = vmatprep.subr.mxu0 0.0
    %121 = vmatpush1.xpose.msra.mxu0 0.0
    %122 = vmatprep.subr.mxu0 0.0
    %123 = vmatpush1.xpose.msra.mxu0 0.0
    %124 = vmatprep.subr.mxu0 0.0
    %125 = vmatpush1.xpose.msra.mxu0 0.0
    %126 = vmatprep.subr.mxu0 0.0
    %127 = vmatpush1.xpose.msra.mxu0 0.0
    %128 = vmatprep.subr.mxu0 0.0
    %129 = vmatpush1.xpose.msra.mxu0 0.0
    %130 = vmatprep.subr.mxu0 0.0
    %131 = vmatpush1.xpose.msra.mxu0 0.0
    %132 = vmatprep.subr.mxu0 0.0
    %133 = vmatpush1.xpose.msra.mxu0 0.0
    %134 = vmatprep.subr.mxu0 0.0
    %135 = vmatpush1.xpose.msra.mxu0 0.0
    %136 = vmatprep.subr.mxu0 0.0
    %137 = vmatpush1.xpose.msra.mxu0 0.0
    %138 = vmatprep.subr.mxu0 0.0
    %139 = vmatpush1.xpose.msra.mxu0 0.0
    %140 = vmatprep.subr.mxu0 0.0
    %141 = vmatpush1.xpose.msra.mxu0 0.0
    %142 = vmatprep.subr.mxu0 0.0
    %143 = vmatpush1.xpose.msra.mxu0 0.0
    %144 = vmatprep.subr.mxu0 0.0
    %145 = vmatpush1.xpose.msra.mxu0 0.0
    %146 = vmatprep.subr.mxu0 0.0
    %147 = vmatpush1.xpose.msra.mxu0 0.0
    %148 = vmatprep.subr.mxu0 0.0
    %149 = vmatpush1.xpose.msra.mxu0 0.0
    %150 = vmatprep.subr.mxu0 0.0
    %151 = vmatpush1.xpose.msra.mxu0 0.0
    %152 = vmatprep.subr.mxu0 0.0
    %153 = vmatpush1.xpose.msra.mxu0 0.0
    %154 = vmatprep.subr.mxu0 0.0
    %155 = vmatpush1.xpose.msra.mxu0 0.0
    %156 = vmatprep.subr.mxu0 0.0
    %157 = vmatpush1.xpose.msra.mxu0 0.0
    %158 = vmatprep.subr.mxu0 0.0
    %159 = vmatpush1.xpose.msra.mxu0 0.0
    %160 = vmatprep.subr.mxu0 0.0
    %161 = vmatpush1.xpose.msra.mxu0 0.0
    %162 = vmatprep.subr.mxu0 0.0
    %163 = vmatpush1.xpose.msra.mxu0 0.0
    %164 = vmatprep.subr.mxu0 0.0
    %165 = vmatpush1.xpose.msra.mxu0 0.0
    %166 = vmatprep.mubr.f32.mxu0 0.0
    %167 = vmatmul.mubr.f32.gmra.mrb[0].mxu0 %v91
    %v168 = vpop.f32.mrb[0].mxu0
    %v169 = vadd.f32 0.0, %v168
    %v170 = vpop.f32.mrb[0].mxu0
    %171 = vmatprep.mubr.f32.mxu0 0.0
    %172 = vmatmul.mubr.f32.gmra.mrb[0].mxu0 %v94
    %v173 = vpop.f32.mrb[0].mxu0
    %v174 = vadd.f32 0.0, %v173
    %v175 = vpop.f32.mrb[0].mxu0
    %176 = vdwg.mxu0
    %v177 = vld [vmem:[#allocation9] sm:$0xff]
    %v178 = vld [vmem:[#allocation9 + $0x8] sm:$0xff]
    %v180 = vsel %vm89, %v85, 0
    %v183 = vsel %vm89, %v86, 0
    %v186 = vsel %vm89, %v177, 0
    %v189 = vsel %vm89, %v178, 0
    %191 = vmatprep.subr.mxu0 0.0
    %192 = vmatpush1.xpose.msra.mxu0 %v186
    %193 = vmatprep.subr.mxu0 0.0
    %194 = vmatpush1.xpose.msra.mxu0 %v189
    %195 = vmatprep.subr.mxu0 0.0
    %196 = vmatpush1.xpose.msra.mxu0 0.0
    %197 = vmatprep.subr.mxu0 0.0
    %198 = vmatpush1.xpose.msra.mxu0 0.0
    %199 = vmatprep.subr.mxu0 0.0
    %200 = vmatpush1.xpose.msra.mxu0 0.0
    %201 = vmatprep.subr.mxu0 0.0
    %202 = vmatpush1.xpose.msra.mxu0 0.0
    %203 = vmatprep.subr.mxu0 0.0
    %204 = vmatpush1.xpose.msra.mxu0 0.0
    %205 = vmatprep.subr.mxu0 0.0
    %206 = vmatpush1.xpose.msra.mxu0 0.0
    %207 = vmatprep.subr.mxu0 0.0
    %208 = vmatpush1.xpose.msra.mxu0 0.0
    %209 = vmatprep.subr.mxu0 0.0
    %210 = vmatpush1.xpose.msra.mxu0 0.0
    %211 = vmatprep.subr.mxu0 0.0
    %212 = vmatpush1.xpose.msra.mxu0 0.0
    %213 = vmatprep.subr.mxu0 0.0
    %214 = vmatpush1.xpose.msra.mxu0 0.0
    %215 = vmatprep.subr.mxu0 0.0
    %216 = vmatpush1.xpose.msra.mxu0 0.0
    %217 = vmatprep.subr.mxu0 0.0
    %218 = vmatpush1.xpose.msra.mxu0 0.0
    %219 = vmatprep.subr.mxu0 0.0
    %220 = vmatpush1.xpose.msra.mxu0 0.0
    %221 = vmatprep.subr.mxu0 0.0
    %222 = vmatpush1.xpose.msra.mxu0 0.0
    %223 = vmatprep.subr.mxu0 0.0
    %224 = vmatpush1.xpose.msra.mxu0 0.0
    %225 = vmatprep.subr.mxu0 0.0
    %226 = vmatpush1.xpose.msra.mxu0 0.0
    %227 = vmatprep.subr.mxu0 0.0
    %228 = vmatpush1.xpose.msra.mxu0 0.0
    %229 = vmatprep.subr.mxu0 0.0
    %230 = vmatpush1.xpose.msra.mxu0 0.0
    %231 = vmatprep.subr.mxu0 0.0
    %232 = vmatpush1.xpose.msra.mxu0 0.0
    %233 = vmatprep.subr.mxu0 0.0
    %234 = vmatpush1.xpose.msra.mxu0 0.0
    %235 = vmatprep.subr.mxu0 0.0
    %236 = vmatpush1.xpose.msra.mxu0 0.0
    %237 = vmatprep.subr.mxu0 0.0
    %238 = vmatpush1.xpose.msra.mxu0 0.0
    %239 = vmatprep.subr.mxu0 0.0
    %240 = vmatpush1.xpose.msra.mxu0 0.0
    %241 = vmatprep.subr.mxu0 0.0
    %242 = vmatpush1.xpose.msra.mxu0 0.0
    %243 = vmatprep.subr.mxu0 0.0
    %244 = vmatpush1.xpose.msra.mxu0 0.0
    %245 = vmatprep.subr.mxu0 0.0
    %246 = vmatpush1.xpose.msra.mxu0 0.0
    %247 = vmatprep.subr.mxu0 0.0
    %248 = vmatpush1.xpose.msra.mxu0 0.0
    %249 = vmatprep.subr.mxu0 0.0
    %250 = vmatpush1.xpose.msra.mxu0 0.0
    %251 = vmatprep.subr.mxu0 0.0
    %252 = vmatpush1.xpose.msra.mxu0 0.0
    %253 = vmatprep.subr.mxu0 0.0
    %254 = vmatpush1.xpose.msra.mxu0 0.0
    %255 = vmatprep.mubr.f32.mxu0 0.0
    %256 = vmatmul.mubr.f32.gmra.mrb[0].mxu0 %v180
    %v257 = vpop.f32.mrb[0].mxu0
    %v258 = vadd.f32 0.0, %v257
    %v259 = vpop.f32.mrb[0].mxu0
    %260 = vmatprep.mubr.f32.mxu0 0.0
    %261 = vmatmul.mubr.f32.gmra.mrb[0].mxu0 %v183
    %v262 = vpop.f32.mrb[0].mxu0
    %v263 = vadd.f32 0.0, %v262
    %v264 = vpop.f32.mrb[0].mxu0
    %265 = vdwg.mxu0
    %v266 = vlaneseq
    %v267 = vand.u32 %v266, 127
    %vm268 = vcmp.lt.s32.totalorder %v267, 12
    %v269 = vsel %vm268, %v169, -1e+30
    %v270 = vsel %vm268, %v174, -1e+30
    %v271 = vsel %vm268, %v258, -1e+30
    %v272 = vsel %vm268, %v263, -1e+30
    %v273 = vmul.f32 %v83, %v80
    %v274 = vmul.f32 %v84, %v81
    %v275 = vsel %vm89, %v273, 0.0
    %276 = vadd.xlane.f32.xlu0 %v275
    %v277 = vpop.xlane.xlu0 %276
    %v278 = vsel %vm89, %v274, 0.0
    %279 = vadd.xlane.f32.xlu0 %v278
    %v280 = vpop.xlane.xlu0 %279
    %vm281 = vcmask 130048
    %v282 = vsel %vm281, %v269, -inf
    %283 = vmax.xlane.f32.xlu0 %v282
    %v284 = vpop.xlane.xlu0 %283
    %v285 = vsel %vm281, %v270, -inf
    %286 = vmax.xlane.f32.xlu0 %v285
    %v287 = vpop.xlane.xlu0 %286
    %v288 = vsub.f32 %v269, %v284
    %v289 = vsub.f32 %v270, %v287
    %v290 = vmul.f32 %v288, 1.442695
    %v291 = vpow.pop %v290
    %v292 = vmul.f32 %v289, 1.442695
    %v293 = vpow.pop %v292
    %v294 = vsel %vm281, %v291, 0.0
    %295 = vadd.xlane.f32.xlu0 %v294
    %v296 = vpop.xlane.xlu0 %295
    %v297 = vsel %vm281, %v293, 0.0
    %298 = vadd.xlane.f32.xlu0 %v297
    %v299 = vpop.xlane.xlu0 %298
    %v300 = vlog2.pop %v296
    %v301 = vmul.f32 %v300, 0.6931472
    %v302 = vlog2.pop %v299
    %v303 = vmul.f32 %v302, 0.6931472
    %v304 = vadd.f32 %v284, %v301
    %v305 = vadd.f32 %v287, %v303
    %v306 = vsub.f32 %v304, %v277
    %v307 = vsub.f32 %v305, %v280
    %v308 = vsel %vm281, %v271, -inf
    %309 = vmax.xlane.f32.xlu0 %v308
    %v310 = vpop.xlane.xlu0 %309
    %v311 = vsel %vm281, %v272, -inf
    %312 = vmax.xlane.f32.xlu0 %v311
    %v313 = vpop.xlane.xlu0 %312
    %v314 = vsub.f32 %v271, %v310
    %v315 = vsub.f32 %v272, %v313
    %v316 = vmul.f32 %v314, 1.442695
    %v317 = vpow.pop %v316
    %v318 = vmul.f32 %v315, 1.442695
    %v319 = vpow.pop %v318
    %v320 = vsel %vm281, %v317, 0.0
    %321 = vadd.xlane.f32.xlu0 %v320
    %v322 = vpop.xlane.xlu0 %321
    %v323 = vsel %vm281, %v319, 0.0
    %324 = vadd.xlane.f32.xlu0 %v323
    %v325 = vpop.xlane.xlu0 %324
    %v326 = vlog2.pop %v322
    %v327 = vmul.f32 %v326, 0.6931472
    %v328 = vlog2.pop %v325
    %v329 = vmul.f32 %v328, 0.6931472
    %v330 = vadd.f32 %v310, %v327
    %v331 = vadd.f32 %v313, %v329
    %v332 = vsub.f32 %v330, %v277
    %v333 = vsub.f32 %v331, %v280
    %s334 = smul.u32 0, 16
    %v335 = vlaneseq
    %v336 = vshrl.u32 %v335, 7
    %v337 = vadd.s32 %v336, 8
    %v338 = vstv %s334
    %v339 = vadd.s32 %v338, %v336
    %v340 = vadd.s32 %v338, %v337
    %vm341 = vcmp.lt.s32.totalorder %v339, 12
    %vm342 = vcmp.lt.s32.totalorder %v340, 12
    %v343 = vsel %vm341, %v306, 0.0
    %v344 = vsel %vm342, %v307, 0.0
    %v345 = vsel %vm341, %v332, 0.0
    %v346 = vsel %vm342, %v333, 0.0
    %vm347 = vcmask 7168
    %v348 = vsel %vm347, %v343, 0.0
    %v349 = vsel %vm347, %v344, 0.0
    %v350 = vadd.f32 %v348, %v349
    %351 = vadd.xlane.f32.xlu0 %v350
    %v352 = vpop.xlane.xlu0 %351
    %v353 = vrot.slane %v352, 4
    %v354 = vadd.f32 %v352, %v353
    %v355 = vrot.slane %v354, 2
    %v356 = vadd.f32 %v354, %v355
    %v357 = vrot.slane %v356, 1
    %v358 = vadd.f32 %v356, %v357
    %s359 = vtos %v358
    %v360 = vsel %vm347, %v345, 0.0
    %v361 = vsel %vm347, %v346, 0.0
    %v362 = vadd.f32 %v360, %v361
    %363 = vadd.xlane.f32.xlu0 %v362
    %v364 = vpop.xlane.xlu0 %363
    %v365 = vrot.slane %v364, 4
    %v366 = vadd.f32 %v364, %v365
    %v367 = vrot.slane %v366, 2
    %v368 = vadd.f32 %v366, %v367
    %v369 = vrot.slane %v368, 1
    %v370 = vadd.f32 %v368, %v369
    %s371 = vtos %v370
    %s372 = sadd.f32 %s359, %s371
    %s373 = smul.f32 %s372, 0.5
    %v374 = vstv %s373
    %375 = vst [vmem:[#allocation11] sm:$0x1] %v374
    // Predicated region
    $region38: #{tpu_custom_call.1} parent=1 // pred_check
      _
    $region39: #{tpu_custom_call.1} parent=1 // pred_check_branch
      %377 = sbr.rel (0) target = $region41
    $region40: #{tpu_custom_call.1} parent=1 // pred_region
      %s379 = ssub.s32 16, 16
      %380 = vsyncadd [#allocation5], %s379
      %s382 = sshll.u32 [#allocation11], 4
      %s383 = int_to_ptr.vmem [resolvable:$true] %s382
      %385 = dma.vmem_to_hbm [thread:$0]  %s383, 16, %s5, [#allocation5]
    $region41: #{tpu_custom_call.1} parent=1 // pred_fallthru
      _
    // Predicated region
    $region42: #{tpu_custom_call.1} parent=1 // pred_check
      _
    $region43: #{tpu_custom_call.1} parent=1 // pred_check_branch
      %387 = sbr.rel (0) target = $region45
    $region44: #{tpu_custom_call.1} parent=1 // pred_region
      %388 = dma.done [#allocation5], 16
    $region45: #{tpu_custom_call.1} parent=1 // pred_fallthru
      _
    %389 = vsyncpa [#allocation4], 1
    %390 = vsyncpa [#allocation7], 1
    %391 = vsyncpa [#allocation10], 1
    %392 = vsyncpa [#allocation5], 1

</llo_original>
